<compile_context>
chip_gen: v6e
topology: v6e:2x2x1
jax: 0.10.0
libtpu: 0.0.40
codegen_flags: <defaults>
</compile_context>

<pallas_src>
from functools import partial

import numpy as np
import jax
import jax.numpy as jnp
from jax import lax
from jax.experimental import pallas as pl
from jax.experimental.pallas import tpu as pltpu


# ----------------------------- filter construction -----------------------------

def _upsample_filt_1d(size: int) -> np.ndarray:
    """1-D bilinear kernel (the 2-D FCN kernel is the outer product of this)."""
    factor = (size + 1) // 2
    center = factor - 1 if size % 2 == 1 else factor - 0.5
    og = np.arange(size, dtype=np.float64)
    return 1.0 - np.abs(og - center) / factor


def _make_upsample_matrix(n_in: int, up_scale: int) -> np.ndarray:
    """Dense (s*n_in, n_in) matrix implementing 1-D ConvTranspose1d
    (stride=s, padding=s//2, kernel_size=2s) with the bilinear filter."""
    s = int(up_scale)
    ksize, pad = 2 * s, s // 2
    f = _upsample_filt_1d(ksize)
    oy = np.arange(n_in * s)[:, None]
    iy = np.arange(n_in)[None, :]
    k = oy + pad - iy * s
    valid = (k >= 0) & (k < ksize)
    return np.where(valid, f[np.clip(k, 0, ksize - 1)], 0.0)


def _make_kron_weight(H: int, W: int, s: int) -> np.ndarray:
    """(H*W, s*s*H*W) weight so that Yflat = Xflat @ K^T reproduces Uh@X@Uw^T."""
    Uh = _make_upsample_matrix(H, s)            # (sH, H)
    Uw = _make_upsample_matrix(W, s)            # (sW, W)
    K = np.kron(Uh, Uw)                         # (sH*sW, H*W)
    return np.ascontiguousarray(K.T).astype(np.float32)


# ------------------------------- block planning ----------------------------------

def _round_up(x: int, m: int) -> int:
    return ((x + m - 1) // m) * m


_MIN_ROWS_MXU = 128          # MXU M-dim floor (when N*C permits)
_PREF_ROWS_MXU = 256
_COL_TILE_CANDIDATES = (4096, 2048, 1024, 512)   # streamed OHW tile widths (lanes)


def _vmem_budget_and_limit() -> tuple[int, int]:
    """Generation-aware VMEM plan: ~62% of capacity for sizing, ~75% as the
    compiler scoped-VMEM limit (v5e/v6e: 80/96 MiB, v7x: 40/48 MiB)."""
    try:
        cap = int(pltpu.get_tpu_info().vmem_capacity_bytes)
    except Exception:
        cap = 64 * 1024 * 1024       # conservative fallback (v7x per-core VMEM)
    return (cap * 5) // 8, (cap * 3) // 4


def _balance_rows(nc: int, rows: int, row_align: int) -> int:
    """Adjust the row block so grid steps come in an even count of near-equal
    blocks (keeps both v7x TensorCores busy); never meaningfully grows VMEM."""
    rows = min(rows, nc)
    steps = pl.cdiv(nc, rows)
    if steps == 1:
        if nc < 2 * max(_MIN_ROWS_MXU, row_align):
            return nc                # too small to be worth splitting
        steps = 2
    elif steps % 2 == 1:
        steps += 1
    return min(_round_up(pl.cdiv(nc, steps), row_align), nc)


def _plan_tiling(nc: int, hw: int, ohw: int,
                 x_size: int, w_size: int, o_size: int,
                 budget: int) -> tuple[int, int]:
    """Pick (row_block B, col_tile TN).  Prefers keeping the full weight resident
    (single-buffered); streams OHW in >=128-lane tiles only when it must."""
    row_align = 8 * max(1, 4 // max(o_size, 1))      # 8 f32 / 16 bf16 / 32 int8
    pref_rows = min(nc, _PREF_ROWS_MXU)

    cands = [ohw]
    if ohw % 128 == 0:
        cands += [t for t in _COL_TILE_CANDIDATES if t < ohw]

    best = None
    for tn in cands:
        n_cols = pl.cdiv(ohw, tn)
        w_bufs = 1 if n_cols == 1 else 2             # resident weight is single-buffered
        resident = w_bufs * hw * tn * w_size
        # double-buffered input/output blocks + f32 matmul intermediate when the
        # output dtype is narrower than f32.
        per_row = 2 * hw * x_size + 2 * tn * o_size + (4 * tn if o_size < 4 else 0)
        avail = budget - resident
        if avail < per_row * min(row_align, nc):
            continue
        rows = int(avail // per_row)
        rows = nc if rows >= nc else max((rows // row_align) * row_align,
                                         min(row_align, nc))
        if best is None or rows > best[0]:
            best = (rows, tn)
        if rows >= pref_rows:
            break
    if best is None:
        # Even the smallest streamed weight tile blows the budget; take the
        # smallest tile and minimum rows (vmem_limit_bytes leaves headroom).
        best = (min(nc, row_align), cands[-1])

    rows, tn = best
    rows = _balance_rows(nc, rows, row_align)
    return rows, tn


def _weight_block_spec(hw: int, tn: int, n_cols: int) -> pl.BlockSpec:
    if n_cols == 1:
        # Constant block index -> weight DMA'd once and resident; single-buffer
        # it so the reclaimed VMEM goes into bigger row blocks.
        try:
            return pl.BlockSpec((hw, tn), lambda i, j: (0, 0),
                                pipeline_mode=pl.Buffered(1))
        except TypeError:            # BlockSpec without pipeline_mode support
            return pl.BlockSpec((hw, tn), lambda i, j: (0, 0))
    return pl.BlockSpec((hw, tn), lambda i, j: (0, j))


# --------------------------------- Pallas kernel --------------------------------

def _bilinear_upsample_kernel(x_ref, w_ref, o_ref):
    # x_ref: (B, H*W)        block of flattened (n, c) slabs, native dtype
    # w_ref: (H*W, TN)       Kronecker weight tile (bf16 for bf16 inputs, else f32)
    # o_ref: (B, TN)         lane-dense output block, native dtype
    x = x_ref[...]
    w = w_ref[...]
    if x.dtype != w.dtype:                  # only for inputs that are not bf16/f32
        x = x.astype(w.dtype)
    y = jnp.dot(x, w, preferred_element_type=jnp.float32)
    o_ref[...] = y.astype(o_ref.dtype)


@partial(jax.jit, static_argnums=1)
def bilinear_interpolation_2d(x: jax.Array, up_scale: int) -> jax.Array:
    """Equivalent of BilinearInterpolation2d(C, C, up_scale)(x) for NCHW x."""
    assert up_scale % 2 == 0, "Scale should be even"        # matches PyTorch module
    N, C, H, W = x.shape
    s = int(up_scale)
    sH, sW = s * H, s * W
    NC, HW, OHW = N * C, H * W, sH * sW

    out_dtype = x.dtype
    # bf16 inputs -> native bf16 MXU matmul (bilinear taps are exact dyadic
    # rationals, so the bf16 weight is bit-exact); everything else stays f32.
    w_dtype = jnp.bfloat16 if x.dtype == jnp.bfloat16 else jnp.float32
    w = jnp.asarray(_make_kron_weight(H, W, s), dtype=w_dtype)   # (HW, OHW)

    x_size = jnp.dtype(x.dtype).itemsize
    o_size = jnp.dtype(out_dtype).itemsize
    w_size = jnp.dtype(w_dtype).itemsize

    budget, vmem_limit = _vmem_budget_and_limit()
    B, TN = _plan_tiling(NC, HW, OHW, x_size, w_size, o_size, budget)
    n_rows = pl.cdiv(NC, B)
    n_cols = pl.cdiv(OHW, TN)

    xf = x.reshape(NC, HW)                                  # free view under jit

    in_row_bytes = HW * x_size
    out_row_bytes = OHW * o_size
    weight_bytes = HW * OHW * w_size
    cost = pl.CostEstimate(
        flops=2 * NC * HW * OHW,
        transcendentals=0,
        bytes_accessed=NC * (in_row_bytes + out_row_bytes)
                       + (1 if n_cols == 1 else n_rows) * weight_bytes,
    )

    out = pl.pallas_call(
        _bilinear_upsample_kernel,
        out_shape=jax.ShapeDtypeStruct((NC, OHW), out_dtype),
        grid_spec=pltpu.PrefetchScalarGridSpec(
            num_scalar_prefetch=0,
            grid=(n_rows, n_cols),
            in_specs=[
                pl.BlockSpec((B, HW), lambda i, j: (i, 0)),
                _weight_block_spec(HW, TN, n_cols),
            ],
            out_specs=pl.BlockSpec((B, TN), lambda i, j: (i, j)),
        ),
        compiler_params=pltpu.CompilerParams(
            dimension_semantics=("parallel", "parallel"),
            vmem_limit_bytes=vmem_limit),
        cost_estimate=cost,
    )(xf, w)

    return out.reshape(N, C, sH, sW)                        # free view, native dtype


# --------------------------------- reference ------------------------------------

def _reference_conv_transpose(x: jax.Array, up_scale: int) -> jax.Array:
    """Pure-JAX reference matching PyTorch ConvTranspose2d with the bilinear kernel."""
    N, C, H, W = x.shape
    s = int(up_scale)
    ksize, pad = 2 * s, s // 2
    f = _upsample_filt_1d(ksize).astype(np.float32)
    bil = np.outer(f, f)                                    # symmetric
    w = np.zeros((C, C, ksize, ksize), dtype=np.float32)    # OIHW
    w[np.arange(C), np.arange(C)] = bil
    # conv_transpose(x, W; stride s, pad p) == conv(x dilated by s, W; pad k-1-p)
    P = ksize - 1 - pad
    return lax.conv_general_dilated(
        x.astype(jnp.float32), jnp.asarray(w),
        window_strides=(1, 1),
        padding=[(P, P), (P, P)],
        lhs_dilation=(s, s),
        dimension_numbers=("NCHW", "OIHW", "NCHW"),
    )


# ----------------------------------- main ----------------------------------------

if __name__ == "__main__":
    key = jax.random.PRNGKey(0)

    configs = [((2, 4, 16, 16), 2, jnp.float32),    # primary shape from the spec
               ((1, 3, 8, 8), 4, jnp.float32),      # second even scale, odd channels
               ((2, 8, 16, 16), 2, jnp.bfloat16)]   # native-bf16 MXU path
    for shape, up_scale, dtype in configs:
        key, sub = jax.random.split(key)
        x = jax.random.normal(sub, shape, dtype=jnp.float32).astype(dtype)

        y = jax.block_until_ready(bilinear_interpolation_2d(x, up_scale))
        y_ref = jax.block_until_ready(_reference_conv_transpose(x, up_scale))

        N, C, H, W = shape
        assert y.shape == (N, C, up_scale * H, up_scale * W)
        assert y.dtype == x.dtype
        if dtype == jnp.float32:
            np.testing.assert_allclose(np.asarray(y), np.asarray(y_ref),
                                       rtol=1e-5, atol=1e-5)
        else:
            np.testing.assert_allclose(np.asarray(y, dtype=np.float32),
                                       np.asarray(y_ref), rtol=2e-2, atol=2e-2)

    print("KERNEL_OK")
</pallas_src>

<mosaic_0001>
module attributes {stable_mosaic.version = 11 : i64} {
  func.func @_bilinear_upsample_kernel(%arg0: i32, %arg1: i32, %arg2: memref<8x256xf32, #tpu.memory_space<vmem>>, %arg3: memref<256x1024xf32, #tpu.memory_space<vmem>>, %arg4: memref<8x1024xf32, #tpu.memory_space<vmem>>) attributes {dimension_semantics = [#tpu.dimension_semantics<parallel>, #tpu.dimension_semantics<parallel>], iteration_bounds = array<i64: 1, 1>, scalar_prefetch = 0 : i64, scratch_operands = 0 : i64, tpu.core_type = #tpu.core_type<tc>, window_params = [{transform_indices = @transform_0, window_bounds = array<i64: 8, 256>}, {pipeline_mode = #tpu.pipeline_mode<synchronous>, transform_indices = @transform_1, window_bounds = array<i64: 256, 1024>}, {transform_indices = @transform_2, window_bounds = array<i64: 8, 1024>}]} {
    %c0 = arith.constant 0 : index
    %c0_0 = arith.constant 0 : index
    %0 = vector.load %arg2[%c0, %c0_0] : memref<8x256xf32, #tpu.memory_space<vmem>>, vector<8x256xf32>
    %c0_1 = arith.constant 0 : index
    %c0_2 = arith.constant 0 : index
    %1 = vector.load %arg3[%c0_1, %c0_2] : memref<256x1024xf32, #tpu.memory_space<vmem>>, vector<256x1024xf32>
    %cst = arith.constant dense<0.000000e+00> : vector<8x1024xf32>
    %2 = tpu.matmul %0, %1, %cst {dimension_numbers = #tpu.dot_dimension_numbers<[1], [0], [0], [1], [0, 0, 1, 1], [], []>} : vector<8x256xf32>, vector<256x1024xf32>, vector<8x1024xf32> -> vector<8x1024xf32>
    %c0_3 = arith.constant 0 : index
    %c0_4 = arith.constant 0 : index
    %3 = vector.load %arg4[%c0_3, %c0_4] : memref<8x1024xf32, #tpu.memory_space<vmem>>, vector<8x1024xf32>
    tpu.vector_store %arg4[%c0_3, %c0_4], %2 {strides = array<i32>} : memref<8x1024xf32, #tpu.memory_space<vmem>>, vector<8x1024xf32>,
    return
  }
  func.func @transform_0(%arg0: i32, %arg1: i32) -> (i32, i32) {
    %c0_i32 = arith.constant 0 : i32
    %c0_i32_0 = arith.constant 0 : i32
    return %arg0, %c0_i32 : i32, i32
  }
  func.func @transform_1(%arg0: i32, %arg1: i32) -> (i32, i32) {
    %c0_i32 = arith.constant 0 : i32
    %c0_i32_0 = arith.constant 0 : i32
    %c0_i32_1 = arith.constant 0 : i32
    return %c0_i32, %c0_i32_0 : i32, i32
  }
  func.func @transform_2(%arg0: i32, %arg1: i32) -> (i32, i32) {
    %c0_i32 = arith.constant 0 : i32
    return %arg0, %arg1 : i32, i32
  }
}

</mosaic_0001>

<llo_original>
// kernel: bilinear_interpolation_2d.1
$region0: #{bilinear_interpolation_2d.1}
  #allocation0 [shape = 'u32[]', space=smem, size = 0x4, offset = 0x4, fixed_abs, tag = 'smem constant byte address 0x4 - core index']
  #allocation1 [shape = 'u32[144,128]{1,0:T(1,128)}', space=vmem, size = 0x12000, scoped, tag = 'internal scratch']
  %s0 = inlined_call_operand.vmem [shape: f32[8,256], index: 0, kind: input, shape index: {}]
  %s1 = inlined_call_operand.hbm [shape: f32[256,1024], index: 1, kind: input, shape index: {}]
  %s2 = inlined_call_operand.vmem [shape: f32[8,1024], index: 2, kind: output, shape index: {}]
  %s3 = sld [smem:[#allocation0]]
  $region22: #{bilinear_interpolation_2d.1} parent=0
    _
  %s5 = ssub.s32 1, %s3
  %s6 = scalar_select 0, %s5, %s3
  $region1: #{bilinear_interpolation_2d.1} parent=0
    #allocation2 [shape = 'u8[1048576]{0}', space=vmem, size = 0x100000, scoped, tag = 'input window, operand 1, single buffered']
    #allocation3 [shape = 's32[1]{0}', space=sflag, size = 0x4, scoped, tag = 'scoped memory for bilinear_interpolation_2d.1']
    %7 = vsyncpa [#allocation3], 0
    // Predicated region
    $region2: #{bilinear_interpolation_2d.1} parent=1 // pred_check
      _
    $region3: #{bilinear_interpolation_2d.1} parent=1 // pred_check_branch
      %9 = sbr.rel (0) target = $region5
    $region4: #{bilinear_interpolation_2d.1} parent=1 // pred_region
      _
    $region5: #{bilinear_interpolation_2d.1} parent=1 // pred_fallthru
      _
    // Predicated region
    $region6: #{bilinear_interpolation_2d.1} parent=1 // pred_check
      _
    $region7: #{bilinear_interpolation_2d.1} parent=1 // pred_check_branch
      %11 = sbr.rel (0) target = $region9
    $region8: #{bilinear_interpolation_2d.1} parent=1 // pred_region
      %s13 = ssub.s32 32768, 32768
      %14 = vsyncadd [#allocation3], %s13
      %s15 = sshll.u32 [#allocation2], 4
      %s16 = int_to_ptr.vmem [resolvable:$true] %s15
      %21 = dma.hbm_to_vmem [thread:$0]  %s1, 32768, %s16, [#allocation3], 1024, 1024, 64
    $region9: #{bilinear_interpolation_2d.1} parent=1 // pred_fallthru
      _
    // Predicated region
    $region10: #{bilinear_interpolation_2d.1} parent=1 // pred_check
      _
    $region11: #{bilinear_interpolation_2d.1} parent=1 // pred_check_branch
      %23 = sbr.rel (0) target = $region13
    $region12: #{bilinear_interpolation_2d.1} parent=1 // pred_region
      %24 = dma.done [#allocation3], 32768
    $region13: #{bilinear_interpolation_2d.1} parent=1 // pred_fallthru
      _
    %v25 = vld [vmem:[%s0] sm:$0xff]
    %v26 = vld [vmem:[%s0 + $0x8] sm:$0xff]
    %v27 = vld [vmem:[#allocation2] sm:$0xff]
    %v28 = vld [vmem:[#allocation2 + $0x8] sm:$0xff]
    %v29 = vld [vmem:[#allocation2 + $0x10] sm:$0xff]
    %v30 = vld [vmem:[#allocation2 + $0x18] sm:$0xff]
    %v31 = vld [vmem:[#allocation2 + $0x20] sm:$0xff]
    %v32 = vld [vmem:[#allocation2 + $0x28] sm:$0xff]
    %v33 = vld [vmem:[#allocation2 + $0x30] sm:$0xff]
    %v34 = vld [vmem:[#allocation2 + $0x38] sm:$0xff]
    %v35 = vld [vmem:[#allocation2 + $0x40] sm:$0xff]
    %v36 = vld [vmem:[#allocation2 + $0x48] sm:$0xff]
    %v37 = vld [vmem:[#allocation2 + $0x50] sm:$0xff]
    %v38 = vld [vmem:[#allocation2 + $0x58] sm:$0xff]
    %v39 = vld [vmem:[#allocation2 + $0x60] sm:$0xff]
    %v40 = vld [vmem:[#allocation2 + $0x68] sm:$0xff]
    %v41 = vld [vmem:[#allocation2 + $0x70] sm:$0xff]
    %v42 = vld [vmem:[#allocation2 + $0x78] sm:$0xff]
    %v43 = vld [vmem:[#allocation2 + $0x80] sm:$0xff]
    %v44 = vld [vmem:[#allocation2 + $0x88] sm:$0xff]
    %v45 = vld [vmem:[#allocation2 + $0x90] sm:$0xff]
    %v46 = vld [vmem:[#allocation2 + $0x98] sm:$0xff]
    %v47 = vld [vmem:[#allocation2 + $0xa0] sm:$0xff]
    %v48 = vld [vmem:[#allocation2 + $0xa8] sm:$0xff]
    %v49 = vld [vmem:[#allocation2 + $0xb0] sm:$0xff]
    %v50 = vld [vmem:[#allocation2 + $0xb8] sm:$0xff]
    %v51 = vld [vmem:[#allocation2 + $0xc0] sm:$0xff]
    %v52 = vld [vmem:[#allocation2 + $0xc8] sm:$0xff]
    %v53 = vld [vmem:[#allocation2 + $0xd0] sm:$0xff]
    %v54 = vld [vmem:[#allocation2 + $0xd8] sm:$0xff]
    %v55 = vld [vmem:[#allocation2 + $0xe0] sm:$0xff]
    %v56 = vld [vmem:[#allocation2 + $0xe8] sm:$0xff]
    %v57 = vld [vmem:[#allocation2 + $0xf0] sm:$0xff]
    %v58 = vld [vmem:[#allocation2 + $0xf8] sm:$0xff]
    %v59 = vld [vmem:[#allocation2 + $0x100] sm:$0xff]
    %v60 = vld [vmem:[#allocation2 + $0x108] sm:$0xff]
    %v61 = vld [vmem:[#allocation2 + $0x110] sm:$0xff]
    %v62 = vld [vmem:[#allocation2 + $0x118] sm:$0xff]
    %v63 = vld [vmem:[#allocation2 + $0x120] sm:$0xff]
    %v64 = vld [vmem:[#allocation2 + $0x128] sm:$0xff]
    %v65 = vld [vmem:[#allocation2 + $0x130] sm:$0xff]
    %v66 = vld [vmem:[#allocation2 + $0x138] sm:$0xff]
    %v67 = vld [vmem:[#allocation2 + $0x140] sm:$0xff]
    %v68 = vld [vmem:[#allocation2 + $0x148] sm:$0xff]
    %v69 = vld [vmem:[#allocation2 + $0x150] sm:$0xff]
    %v70 = vld [vmem:[#allocation2 + $0x158] sm:$0xff]
    %v71 = vld [vmem:[#allocation2 + $0x160] sm:$0xff]
    %v72 = vld [vmem:[#allocation2 + $0x168] sm:$0xff]
    %v73 = vld [vmem:[#allocation2 + $0x170] sm:$0xff]
    %v74 = vld [vmem:[#allocation2 + $0x178] sm:$0xff]
    %v75 = vld [vmem:[#allocation2 + $0x180] sm:$0xff]
    %v76 = vld [vmem:[#allocation2 + $0x188] sm:$0xff]
    %v77 = vld [vmem:[#allocation2 + $0x190] sm:$0xff]
    %v78 = vld [vmem:[#allocation2 + $0x198] sm:$0xff]
    %v79 = vld [vmem:[#allocation2 + $0x1a0] sm:$0xff]
    %v80 = vld [vmem:[#allocation2 + $0x1a8] sm:$0xff]
    %v81 = vld [vmem:[#allocation2 + $0x1b0] sm:$0xff]
    %v82 = vld [vmem:[#allocation2 + $0x1b8] sm:$0xff]
    %v83 = vld [vmem:[#allocation2 + $0x1c0] sm:$0xff]
    %v84 = vld [vmem:[#allocation2 + $0x1c8] sm:$0xff]
    %v85 = vld [vmem:[#allocation2 + $0x1d0] sm:$0xff]
    %v86 = vld [vmem:[#allocation2 + $0x1d8] sm:$0xff]
    %v87 = vld [vmem:[#allocation2 + $0x1e0] sm:$0xff]
    %v88 = vld [vmem:[#allocation2 + $0x1e8] sm:$0xff]
    %v89 = vld [vmem:[#allocation2 + $0x1f0] sm:$0xff]
    %v90 = vld [vmem:[#allocation2 + $0x1f8] sm:$0xff]
    %v91 = vld [vmem:[#allocation2 + $0x200] sm:$0xff]
    %v92 = vld [vmem:[#allocation2 + $0x208] sm:$0xff]
    %v93 = vld [vmem:[#allocation2 + $0x210] sm:$0xff]
    %v94 = vld [vmem:[#allocation2 + $0x218] sm:$0xff]
    %v95 = vld [vmem:[#allocation2 + $0x220] sm:$0xff]
    %v96 = vld [vmem:[#allocation2 + $0x228] sm:$0xff]
    %v97 = vld [vmem:[#allocation2 + $0x230] sm:$0xff]
    %v98 = vld [vmem:[#allocation2 + $0x238] sm:$0xff]
    %v99 = vld [vmem:[#allocation2 + $0x240] sm:$0xff]
    %v100 = vld [vmem:[#allocation2 + $0x248] sm:$0xff]
    %v101 = vld [vmem:[#allocation2 + $0x250] sm:$0xff]
    %v102 = vld [vmem:[#allocation2 + $0x258] sm:$0xff]
    %v103 = vld [vmem:[#allocation2 + $0x260] sm:$0xff]
    %v104 = vld [vmem:[#allocation2 + $0x268] sm:$0xff]
    %v105 = vld [vmem:[#allocation2 + $0x270] sm:$0xff]
    %v106 = vld [vmem:[#allocation2 + $0x278] sm:$0xff]
    %v107 = vld [vmem:[#allocation2 + $0x280] sm:$0xff]
    %v108 = vld [vmem:[#allocation2 + $0x288] sm:$0xff]
    %v109 = vld [vmem:[#allocation2 + $0x290] sm:$0xff]
    %v110 = vld [vmem:[#allocation2 + $0x298] sm:$0xff]
    %v111 = vld [vmem:[#allocation2 + $0x2a0] sm:$0xff]
    %v112 = vld [vmem:[#allocation2 + $0x2a8] sm:$0xff]
    %v113 = vld [vmem:[#allocation2 + $0x2b0] sm:$0xff]
    %v114 = vld [vmem:[#allocation2 + $0x2b8] sm:$0xff]
    %v115 = vld [vmem:[#allocation2 + $0x2c0] sm:$0xff]
    %v116 = vld [vmem:[#allocation2 + $0x2c8] sm:$0xff]
    %v117 = vld [vmem:[#allocation2 + $0x2d0] sm:$0xff]
    %v118 = vld [vmem:[#allocation2 + $0x2d8] sm:$0xff]
    %v119 = vld [vmem:[#allocation2 + $0x2e0] sm:$0xff]
    %v120 = vld [vmem:[#allocation2 + $0x2e8] sm:$0xff]
    %v121 = vld [vmem:[#allocation2 + $0x2f0] sm:$0xff]
    %v122 = vld [vmem:[#allocation2 + $0x2f8] sm:$0xff]
    %v123 = vld [vmem:[#allocation2 + $0x300] sm:$0xff]
    %v124 = vld [vmem:[#allocation2 + $0x308] sm:$0xff]
    %v125 = vld [vmem:[#allocation2 + $0x310] sm:$0xff]
    %v126 = vld [vmem:[#allocation2 + $0x318] sm:$0xff]
    %v127 = vld [vmem:[#allocation2 + $0x320] sm:$0xff]
    %v128 = vld [vmem:[#allocation2 + $0x328] sm:$0xff]
    %v129 = vld [vmem:[#allocation2 + $0x330] sm:$0xff]
    %v130 = vld [vmem:[#allocation2 + $0x338] sm:$0xff]
    %v131 = vld [vmem:[#allocation2 + $0x340] sm:$0xff]
    %v132 = vld [vmem:[#allocation2 + $0x348] sm:$0xff]
    %v133 = vld [vmem:[#allocation2 + $0x350] sm:$0xff]
    %v134 = vld [vmem:[#allocation2 + $0x358] sm:$0xff]
    %v135 = vld [vmem:[#allocation2 + $0x360] sm:$0xff]
    %v136 = vld [vmem:[#allocation2 + $0x368] sm:$0xff]
    %v137 = vld [vmem:[#allocation2 + $0x370] sm:$0xff]
    %v138 = vld [vmem:[#allocation2 + $0x378] sm:$0xff]
    %v139 = vld [vmem:[#allocation2 + $0x380] sm:$0xff]
    %v140 = vld [vmem:[#allocation2 + $0x388] sm:$0xff]
    %v141 = vld [vmem:[#allocation2 + $0x390] sm:$0xff]
    %v142 = vld [vmem:[#allocation2 + $0x398] sm:$0xff]
    %v143 = vld [vmem:[#allocation2 + $0x3a0] sm:$0xff]
    %v144 = vld [vmem:[#allocation2 + $0x3a8] sm:$0xff]
    %v145 = vld [vmem:[#allocation2 + $0x3b0] sm:$0xff]
    %v146 = vld [vmem:[#allocation2 + $0x3b8] sm:$0xff]
    %v147 = vld [vmem:[#allocation2 + $0x3c0] sm:$0xff]
    %v148 = vld [vmem:[#allocation2 + $0x3c8] sm:$0xff]
    %v149 = vld [vmem:[#allocation2 + $0x3d0] sm:$0xff]
    %v150 = vld [vmem:[#allocation2 + $0x3d8] sm:$0xff]
    %v151 = vld [vmem:[#allocation2 + $0x3e0] sm:$0xff]
    %v152 = vld [vmem:[#allocation2 + $0x3e8] sm:$0xff]
    %v153 = vld [vmem:[#allocation2 + $0x3f0] sm:$0xff]
    %v154 = vld [vmem:[#allocation2 + $0x3f8] sm:$0xff]
    %v155 = vld [vmem:[#allocation2 + $0x400] sm:$0xff]
    %v156 = vld [vmem:[#allocation2 + $0x408] sm:$0xff]
    %v157 = vld [vmem:[#allocation2 + $0x410] sm:$0xff]
    %v158 = vld [vmem:[#allocation2 + $0x418] sm:$0xff]
    %v159 = vld [vmem:[#allocation2 + $0x420] sm:$0xff]
    %v160 = vld [vmem:[#allocation2 + $0x428] sm:$0xff]
    %v161 = vld [vmem:[#allocation2 + $0x430] sm:$0xff]
    %v162 = vld [vmem:[#allocation2 + $0x438] sm:$0xff]
    %v163 = vld [vmem:[#allocation2 + $0x440] sm:$0xff]
    %v164 = vld [vmem:[#allocation2 + $0x448] sm:$0xff]
    %v165 = vld [vmem:[#allocation2 + $0x450] sm:$0xff]
    %v166 = vld [vmem:[#allocation2 + $0x458] sm:$0xff]
    %v167 = vld [vmem:[#allocation2 + $0x460] sm:$0xff]
    %v168 = vld [vmem:[#allocation2 + $0x468] sm:$0xff]
    %v169 = vld [vmem:[#allocation2 + $0x470] sm:$0xff]
    %v170 = vld [vmem:[#allocation2 + $0x478] sm:$0xff]
    %v171 = vld [vmem:[#allocation2 + $0x480] sm:$0xff]
    %v172 = vld [vmem:[#allocation2 + $0x488] sm:$0xff]
    %v173 = vld [vmem:[#allocation2 + $0x490] sm:$0xff]
    %v174 = vld [vmem:[#allocation2 + $0x498] sm:$0xff]
    %v175 = vld [vmem:[#allocation2 + $0x4a0] sm:$0xff]
    %v176 = vld [vmem:[#allocation2 + $0x4a8] sm:$0xff]
    %v177 = vld [vmem:[#allocation2 + $0x4b0] sm:$0xff]
    %v178 = vld [vmem:[#allocation2 + $0x4b8] sm:$0xff]
    %v179 = vld [vmem:[#allocation2 + $0x4c0] sm:$0xff]
    %v180 = vld [vmem:[#allocation2 + $0x4c8] sm:$0xff]
    %v181 = vld [vmem:[#allocation2 + $0x4d0] sm:$0xff]
    %v182 = vld [vmem:[#allocation2 + $0x4d8] sm:$0xff]
    %v183 = vld [vmem:[#allocation2 + $0x4e0] sm:$0xff]
    %v184 = vld [vmem:[#allocation2 + $0x4e8] sm:$0xff]
    %v185 = vld [vmem:[#allocation2 + $0x4f0] sm:$0xff]
    %v186 = vld [vmem:[#allocation2 + $0x4f8] sm:$0xff]
    %v187 = vld [vmem:[#allocation2 + $0x500] sm:$0xff]
    %v188 = vld [vmem:[#allocation2 + $0x508] sm:$0xff]
    %v189 = vld [vmem:[#allocation2 + $0x510] sm:$0xff]
    %v190 = vld [vmem:[#allocation2 + $0x518] sm:$0xff]
    %v191 = vld [vmem:[#allocation2 + $0x520] sm:$0xff]
    %v192 = vld [vmem:[#allocation2 + $0x528] sm:$0xff]
    %v193 = vld [vmem:[#allocation2 + $0x530] sm:$0xff]
    %v194 = vld [vmem:[#allocation2 + $0x538] sm:$0xff]
    %v195 = vld [vmem:[#allocation2 + $0x540] sm:$0xff]
    %v196 = vld [vmem:[#allocation2 + $0x548] sm:$0xff]
    %v197 = vld [vmem:[#allocation2 + $0x550] sm:$0xff]
    %v198 = vld [vmem:[#allocation2 + $0x558] sm:$0xff]
    %v199 = vld [vmem:[#allocation2 + $0x560] sm:$0xff]
    %v200 = vld [vmem:[#allocation2 + $0x568] sm:$0xff]
    %v201 = vld [vmem:[#allocation2 + $0x570] sm:$0xff]
    %v202 = vld [vmem:[#allocation2 + $0x578] sm:$0xff]
    %v203 = vld [vmem:[#allocation2 + $0x580] sm:$0xff]
    %v204 = vld [vmem:[#allocation2 + $0x588] sm:$0xff]
    %v205 = vld [vmem:[#allocation2 + $0x590] sm:$0xff]
    %v206 = vld [vmem:[#allocation2 + $0x598] sm:$0xff]
    %v207 = vld [vmem:[#allocation2 + $0x5a0] sm:$0xff]
    %v208 = vld [vmem:[#allocation2 + $0x5a8] sm:$0xff]
    %v209 = vld [vmem:[#allocation2 + $0x5b0] sm:$0xff]
    %v210 = vld [vmem:[#allocation2 + $0x5b8] sm:$0xff]
    %v211 = vld [vmem:[#allocation2 + $0x5c0] sm:$0xff]
    %v212 = vld [vmem:[#allocation2 + $0x5c8] sm:$0xff]
    %v213 = vld [vmem:[#allocation2 + $0x5d0] sm:$0xff]
    %v214 = vld [vmem:[#allocation2 + $0x5d8] sm:$0xff]
    %v215 = vld [vmem:[#allocation2 + $0x5e0] sm:$0xff]
    %v216 = vld [vmem:[#allocation2 + $0x5e8] sm:$0xff]
    %v217 = vld [vmem:[#allocation2 + $0x5f0] sm:$0xff]
    %v218 = vld [vmem:[#allocation2 + $0x5f8] sm:$0xff]
    %v219 = vld [vmem:[#allocation2 + $0x600] sm:$0xff]
    %v220 = vld [vmem:[#allocation2 + $0x608] sm:$0xff]
    %v221 = vld [vmem:[#allocation2 + $0x610] sm:$0xff]
    %v222 = vld [vmem:[#allocation2 + $0x618] sm:$0xff]
    %v223 = vld [vmem:[#allocation2 + $0x620] sm:$0xff]
    %v224 = vld [vmem:[#allocation2 + $0x628] sm:$0xff]
    %v225 = vld [vmem:[#allocation2 + $0x630] sm:$0xff]
    %v226 = vld [vmem:[#allocation2 + $0x638] sm:$0xff]
    %v227 = vld [vmem:[#allocation2 + $0x640] sm:$0xff]
    %v228 = vld [vmem:[#allocation2 + $0x648] sm:$0xff]
    %v229 = vld [vmem:[#allocation2 + $0x650] sm:$0xff]
    %v230 = vld [vmem:[#allocation2 + $0x658] sm:$0xff]
    %v231 = vld [vmem:[#allocation2 + $0x660] sm:$0xff]
    %v232 = vld [vmem:[#allocation2 + $0x668] sm:$0xff]
    %v233 = vld [vmem:[#allocation2 + $0x670] sm:$0xff]
    %v234 = vld [vmem:[#allocation2 + $0x678] sm:$0xff]
    %v235 = vld [vmem:[#allocation2 + $0x680] sm:$0xff]
    %v236 = vld [vmem:[#allocation2 + $0x688] sm:$0xff]
    %v237 = vld [vmem:[#allocation2 + $0x690] sm:$0xff]
    %v238 = vld [vmem:[#allocation2 + $0x698] sm:$0xff]
    %v239 = vld [vmem:[#allocation2 + $0x6a0] sm:$0xff]
    %v240 = vld [vmem:[#allocation2 + $0x6a8] sm:$0xff]
    %v241 = vld [vmem:[#allocation2 + $0x6b0] sm:$0xff]
    %v242 = vld [vmem:[#allocation2 + $0x6b8] sm:$0xff]
    %v243 = vld [vmem:[#allocation2 + $0x6c0] sm:$0xff]
    %v244 = vld [vmem:[#allocation2 + $0x6c8] sm:$0xff]
    %v245 = vld [vmem:[#allocation2 + $0x6d0] sm:$0xff]
    %v246 = vld [vmem:[#allocation2 + $0x6d8] sm:$0xff]
    %v247 = vld [vmem:[#allocation2 + $0x6e0] sm:$0xff]
    %v248 = vld [vmem:[#allocation2 + $0x6e8] sm:$0xff]
    %v249 = vld [vmem:[#allocation2 + $0x6f0] sm:$0xff]
    %v250 = vld [vmem:[#allocation2 + $0x6f8] sm:$0xff]
    %v251 = vld [vmem:[#allocation2 + $0x700] sm:$0xff]
    %v252 = vld [vmem:[#allocation2 + $0x708] sm:$0xff]
    %v253 = vld [vmem:[#allocation2 + $0x710] sm:$0xff]
    %v254 = vld [vmem:[#allocation2 + $0x718] sm:$0xff]
    %v255 = vld [vmem:[#allocation2 + $0x720] sm:$0xff]
    %v256 = vld [vmem:[#allocation2 + $0x728] sm:$0xff]
    %v257 = vld [vmem:[#allocation2 + $0x730] sm:$0xff]
    %v258 = vld [vmem:[#allocation2 + $0x738] sm:$0xff]
    %v259 = vld [vmem:[#allocation2 + $0x740] sm:$0xff]
    %v260 = vld [vmem:[#allocation2 + $0x748] sm:$0xff]
    %v261 = vld [vmem:[#allocation2 + $0x750] sm:$0xff]
    %v262 = vld [vmem:[#allocation2 + $0x758] sm:$0xff]
    %v263 = vld [vmem:[#allocation2 + $0x760] sm:$0xff]
    %v264 = vld [vmem:[#allocation2 + $0x768] sm:$0xff]
    %v265 = vld [vmem:[#allocation2 + $0x770] sm:$0xff]
    %v266 = vld [vmem:[#allocation2 + $0x778] sm:$0xff]
    %v267 = vld [vmem:[#allocation2 + $0x780] sm:$0xff]
    %v268 = vld [vmem:[#allocation2 + $0x788] sm:$0xff]
    %v269 = vld [vmem:[#allocation2 + $0x790] sm:$0xff]
    %v270 = vld [vmem:[#allocation2 + $0x798] sm:$0xff]
    %v271 = vld [vmem:[#allocation2 + $0x7a0] sm:$0xff]
    %v272 = vld [vmem:[#allocation2 + $0x7a8] sm:$0xff]
    %v273 = vld [vmem:[#allocation2 + $0x7b0] sm:$0xff]
    %v274 = vld [vmem:[#allocation2 + $0x7b8] sm:$0xff]
    %v275 = vld [vmem:[#allocation2 + $0x7c0] sm:$0xff]
    %v276 = vld [vmem:[#allocation2 + $0x7c8] sm:$0xff]
    %v277 = vld [vmem:[#allocation2 + $0x7d0] sm:$0xff]
    %v278 = vld [vmem:[#allocation2 + $0x7d8] sm:$0xff]
    %v279 = vld [vmem:[#allocation2 + $0x7e0] sm:$0xff]
    %v280 = vld [vmem:[#allocation2 + $0x7e8] sm:$0xff]
    %v281 = vld [vmem:[#allocation2 + $0x7f0] sm:$0xff]
    %v282 = vld [vmem:[#allocation2 + $0x7f8] sm:$0xff]
    %283 = vmatprep.subr.mxu0 %v148
    %284 = vmatpush1.msra.mxu0 %v147
    %285 = vmatprep.subr.mxu0 %v140
    %286 = vmatpush1.msra.mxu0 %v139
    %287 = vmatprep.subr.mxu0 %v132
    %288 = vmatpush1.msra.mxu0 %v131
    %289 = vmatprep.subr.mxu0 %v124
    %290 = vmatpush1.msra.mxu0 %v123
    %291 = vmatprep.subr.mxu0 %v116
    %292 = vmatpush1.msra.mxu0 %v115
    %293 = vmatprep.subr.mxu0 %v108
    %294 = vmatpush1.msra.mxu0 %v107
    %295 = vmatprep.subr.mxu0 %v100
    %296 = vmatpush1.msra.mxu0 %v99
    %297 = vmatprep.subr.mxu0 %v92
    %298 = vmatpush1.msra.mxu0 %v91
    %299 = vmatprep.subr.mxu0 %v84
    %300 = vmatpush1.msra.mxu0 %v83
    %301 = vmatprep.subr.mxu0 %v76
    %302 = vmatpush1.msra.mxu0 %v75
    %303 = vmatprep.subr.mxu0 %v68
    %304 = vmatpush1.msra.mxu0 %v67
    %305 = vmatprep.subr.mxu0 %v60
    %306 = vmatpush1.msra.mxu0 %v59
    %307 = vmatprep.subr.mxu0 %v52
    %308 = vmatpush1.msra.mxu0 %v51
    %309 = vmatprep.subr.mxu0 %v44
    %310 = vmatpush1.msra.mxu0 %v43
    %311 = vmatprep.subr.mxu0 %v36
    %312 = vmatpush1.msra.mxu0 %v35
    %313 = vmatprep.subr.mxu0 %v28
    %314 = vmatpush1.msra.mxu0 %v27
    %315 = vmatprep.subr.mxu0 %v276
    %316 = vmatpush2.msra.mxu0 %v275
    %317 = vmatprep.subr.mxu0 %v268
    %318 = vmatpush2.msra.mxu0 %v267
    %319 = vmatprep.subr.mxu0 %v260
    %320 = vmatpush2.msra.mxu0 %v259
    %321 = vmatprep.subr.mxu0 %v252
    %322 = vmatpush2.msra.mxu0 %v251
    %323 = vmatprep.subr.mxu0 %v244
    %324 = vmatpush2.msra.mxu0 %v243
    %325 = vmatprep.subr.mxu0 %v236
    %326 = vmatpush2.msra.mxu0 %v235
    %327 = vmatprep.subr.mxu0 %v228
    %328 = vmatpush2.msra.mxu0 %v227
    %329 = vmatprep.subr.mxu0 %v220
    %330 = vmatpush2.msra.mxu0 %v219
    %331 = vmatprep.subr.mxu0 %v212
    %332 = vmatpush2.msra.mxu0 %v211
    %333 = vmatprep.subr.mxu0 %v204
    %334 = vmatpush2.msra.mxu0 %v203
    %335 = vmatprep.subr.mxu0 %v196
    %336 = vmatpush2.msra.mxu0 %v195
    %337 = vmatprep.subr.mxu0 %v188
    %338 = vmatpush2.msra.mxu0 %v187
    %339 = vmatprep.subr.mxu0 %v180
    %340 = vmatpush2.msra.mxu0 %v179
    %341 = vmatprep.subr.mxu0 %v172
    %342 = vmatpush2.msra.mxu0 %v171
    %343 = vmatprep.subr.mxu0 %v164
    %344 = vmatpush2.msra.mxu0 %v163
    %345 = vmatprep.subr.mxu0 %v156
    %346 = vmatpush2.msra.mxu0 %v155
    %347 = vmatprep.mubr.f32.mxu0 %v26
    %348 = vmatmul.mubr.f32.gmra.mxu0 %v25
    %v349 = vpop.f32.mrf.mxu0
    %v350 = vadd.f32 0.0, %v349
    %v351 = vpop.f32.mrf.mxu0
    %v352 = vadd.f32 0.0, %v351
    %353 = vdwg.mxu0
    %354 = vmatprep.subr.mxu0 %v150
    %355 = vmatpush1.msra.mxu0 %v149
    %356 = vmatprep.subr.mxu0 %v142
    %357 = vmatpush1.msra.mxu0 %v141
    %358 = vmatprep.subr.mxu0 %v134
    %359 = vmatpush1.msra.mxu0 %v133
    %360 = vmatprep.subr.mxu0 %v126
    %361 = vmatpush1.msra.mxu0 %v125
    %362 = vmatprep.subr.mxu0 %v118
    %363 = vmatpush1.msra.mxu0 %v117
    %364 = vmatprep.subr.mxu0 %v110
    %365 = vmatpush1.msra.mxu0 %v109
    %366 = vmatprep.subr.mxu0 %v102
    %367 = vmatpush1.msra.mxu0 %v101
    %368 = vmatprep.subr.mxu0 %v94
    %369 = vmatpush1.msra.mxu0 %v93
    %370 = vmatprep.subr.mxu0 %v86
    %371 = vmatpush1.msra.mxu0 %v85
    %372 = vmatprep.subr.mxu0 %v78
    %373 = vmatpush1.msra.mxu0 %v77
    %374 = vmatprep.subr.mxu0 %v70
    %375 = vmatpush1.msra.mxu0 %v69
    %376 = vmatprep.subr.mxu0 %v62
    %377 = vmatpush1.msra.mxu0 %v61
    %378 = vmatprep.subr.mxu0 %v54
    %379 = vmatpush1.msra.mxu0 %v53
    %380 = vmatprep.subr.mxu0 %v46
    %381 = vmatpush1.msra.mxu0 %v45
    %382 = vmatprep.subr.mxu0 %v38
    %383 = vmatpush1.msra.mxu0 %v37
    %384 = vmatprep.subr.mxu0 %v30
    %385 = vmatpush1.msra.mxu0 %v29
    %386 = vmatprep.subr.mxu0 %v278
    %387 = vmatpush2.msra.mxu0 %v277
    %388 = vmatprep.subr.mxu0 %v270
    %389 = vmatpush2.msra.mxu0 %v269
    %390 = vmatprep.subr.mxu0 %v262
    %391 = vmatpush2.msra.mxu0 %v261
    %392 = vmatprep.subr.mxu0 %v254
    %393 = vmatpush2.msra.mxu0 %v253
    %394 = vmatprep.subr.mxu0 %v246
    %395 = vmatpush2.msra.mxu0 %v245
    %396 = vmatprep.subr.mxu0 %v238
    %397 = vmatpush2.msra.mxu0 %v237
    %398 = vmatprep.subr.mxu0 %v230
    %399 = vmatpush2.msra.mxu0 %v229
    %400 = vmatprep.subr.mxu0 %v222
    %401 = vmatpush2.msra.mxu0 %v221
    %402 = vmatprep.subr.mxu0 %v214
    %403 = vmatpush2.msra.mxu0 %v213
    %404 = vmatprep.subr.mxu0 %v206
    %405 = vmatpush2.msra.mxu0 %v205
    %406 = vmatprep.subr.mxu0 %v198
    %407 = vmatpush2.msra.mxu0 %v197
    %408 = vmatprep.subr.mxu0 %v190
    %409 = vmatpush2.msra.mxu0 %v189
    %410 = vmatprep.subr.mxu0 %v182
    %411 = vmatpush2.msra.mxu0 %v181
    %412 = vmatprep.subr.mxu0 %v174
    %413 = vmatpush2.msra.mxu0 %v173
    %414 = vmatprep.subr.mxu0 %v166
    %415 = vmatpush2.msra.mxu0 %v165
    %416 = vmatprep.subr.mxu0 %v158
    %417 = vmatpush2.msra.mxu0 %v157
    %418 = vmatprep.mubr.f32.mxu0 %v26
    %419 = vmatmul.mubr.f32.gmra.mxu0 %v25
    %v420 = vpop.f32.mrf.mxu0
    %v421 = vadd.f32 0.0, %v420
    %v422 = vpop.f32.mrf.mxu0
    %v423 = vadd.f32 0.0, %v422
    %424 = vdwg.mxu0
    %425 = vmatprep.subr.mxu0 %v152
    %426 = vmatpush1.msra.mxu0 %v151
    %427 = vmatprep.subr.mxu0 %v144
    %428 = vmatpush1.msra.mxu0 %v143
    %429 = vmatprep.subr.mxu0 %v136
    %430 = vmatpush1.msra.mxu0 %v135
    %431 = vmatprep.subr.mxu0 %v128
    %432 = vmatpush1.msra.mxu0 %v127
    %433 = vmatprep.subr.mxu0 %v120
    %434 = vmatpush1.msra.mxu0 %v119
    %435 = vmatprep.subr.mxu0 %v112
    %436 = vmatpush1.msra.mxu0 %v111
    %437 = vmatprep.subr.mxu0 %v104
    %438 = vmatpush1.msra.mxu0 %v103
    %439 = vmatprep.subr.mxu0 %v96
    %440 = vmatpush1.msra.mxu0 %v95
    %441 = vmatprep.subr.mxu0 %v88
    %442 = vmatpush1.msra.mxu0 %v87
    %443 = vmatprep.subr.mxu0 %v80
    %444 = vmatpush1.msra.mxu0 %v79
    %445 = vmatprep.subr.mxu0 %v72
    %446 = vmatpush1.msra.mxu0 %v71
    %447 = vmatprep.subr.mxu0 %v64
    %448 = vmatpush1.msra.mxu0 %v63
    %449 = vmatprep.subr.mxu0 %v56
    %450 = vmatpush1.msra.mxu0 %v55
    %451 = vmatprep.subr.mxu0 %v48
    %452 = vmatpush1.msra.mxu0 %v47
    %453 = vmatprep.subr.mxu0 %v40
    %454 = vmatpush1.msra.mxu0 %v39
    %455 = vmatprep.subr.mxu0 %v32
    %456 = vmatpush1.msra.mxu0 %v31
    %457 = vmatprep.subr.mxu0 %v280
    %458 = vmatpush2.msra.mxu0 %v279
    %459 = vmatprep.subr.mxu0 %v272
    %460 = vmatpush2.msra.mxu0 %v271
    %461 = vmatprep.subr.mxu0 %v264
    %462 = vmatpush2.msra.mxu0 %v263
    %463 = vmatprep.subr.mxu0 %v256
    %464 = vmatpush2.msra.mxu0 %v255
    %465 = vmatprep.subr.mxu0 %v248
    %466 = vmatpush2.msra.mxu0 %v247
    %467 = vmatprep.subr.mxu0 %v240
    %468 = vmatpush2.msra.mxu0 %v239
    %469 = vmatprep.subr.mxu0 %v232
    %470 = vmatpush2.msra.mxu0 %v231
    %471 = vmatprep.subr.mxu0 %v224
    %472 = vmatpush2.msra.mxu0 %v223
    %473 = vmatprep.subr.mxu0 %v216
    %474 = vmatpush2.msra.mxu0 %v215
    %475 = vmatprep.subr.mxu0 %v208
    %476 = vmatpush2.msra.mxu0 %v207
    %477 = vmatprep.subr.mxu0 %v200
    %478 = vmatpush2.msra.mxu0 %v199
    %479 = vmatprep.subr.mxu0 %v192
    %480 = vmatpush2.msra.mxu0 %v191
    %481 = vmatprep.subr.mxu0 %v184
    %482 = vmatpush2.msra.mxu0 %v183
    %483 = vmatprep.subr.mxu0 %v176
    %484 = vmatpush2.msra.mxu0 %v175
    %485 = vmatprep.subr.mxu0 %v168
    %486 = vmatpush2.msra.mxu0 %v167
    %487 = vmatprep.subr.mxu0 %v160
    %488 = vmatpush2.msra.mxu0 %v159
    %489 = vmatprep.mubr.f32.mxu0 %v26
    %490 = vmatmul.mubr.f32.gmra.mxu0 %v25
    %v491 = vpop.f32.mrf.mxu0
    %v492 = vadd.f32 0.0, %v491
    %v493 = vpop.f32.mrf.mxu0
    %v494 = vadd.f32 0.0, %v493
    %495 = vdwg.mxu0
    %496 = vmatprep.subr.mxu0 %v154
    %497 = vmatpush1.msra.mxu0 %v153
    %498 = vmatprep.subr.mxu0 %v146
    %499 = vmatpush1.msra.mxu0 %v145
    %500 = vmatprep.subr.mxu0 %v138
    %501 = vmatpush1.msra.mxu0 %v137
    %502 = vmatprep.subr.mxu0 %v130
    %503 = vmatpush1.msra.mxu0 %v129
    %504 = vmatprep.subr.mxu0 %v122
    %505 = vmatpush1.msra.mxu0 %v121
    %506 = vmatprep.subr.mxu0 %v114
    %507 = vmatpush1.msra.mxu0 %v113
    %508 = vmatprep.subr.mxu0 %v106
    %509 = vmatpush1.msra.mxu0 %v105
    %510 = vmatprep.subr.mxu0 %v98
    %511 = vmatpush1.msra.mxu0 %v97
    %512 = vmatprep.subr.mxu0 %v90
    %513 = vmatpush1.msra.mxu0 %v89
    %514 = vmatprep.subr.mxu0 %v82
    %515 = vmatpush1.msra.mxu0 %v81
    %516 = vmatprep.subr.mxu0 %v74
    %517 = vmatpush1.msra.mxu0 %v73
    %518 = vmatprep.subr.mxu0 %v66
    %519 = vmatpush1.msra.mxu0 %v65
    %520 = vmatprep.subr.mxu0 %v58
    %521 = vmatpush1.msra.mxu0 %v57
    %522 = vmatprep.subr.mxu0 %v50
    %523 = vmatpush1.msra.mxu0 %v49
    %524 = vmatprep.subr.mxu0 %v42
    %525 = vmatpush1.msra.mxu0 %v41
    %526 = vmatprep.subr.mxu0 %v34
    %527 = vmatpush1.msra.mxu0 %v33
    %528 = vmatprep.subr.mxu0 %v282
    %529 = vmatpush2.msra.mxu0 %v281
    %530 = vmatprep.subr.mxu0 %v274
    %531 = vmatpush2.msra.mxu0 %v273
    %532 = vmatprep.subr.mxu0 %v266
    %533 = vmatpush2.msra.mxu0 %v265
    %534 = vmatprep.subr.mxu0 %v258
    %535 = vmatpush2.msra.mxu0 %v257
    %536 = vmatprep.subr.mxu0 %v250
    %537 = vmatpush2.msra.mxu0 %v249
    %538 = vmatprep.subr.mxu0 %v242
    %539 = vmatpush2.msra.mxu0 %v241
    %540 = vmatprep.subr.mxu0 %v234
    %541 = vmatpush2.msra.mxu0 %v233
    %542 = vmatprep.subr.mxu0 %v226
    %543 = vmatpush2.msra.mxu0 %v225
    %544 = vmatprep.subr.mxu0 %v218
    %545 = vmatpush2.msra.mxu0 %v217
    %546 = vmatprep.subr.mxu0 %v210
    %547 = vmatpush2.msra.mxu0 %v209
    %548 = vmatprep.subr.mxu0 %v202
    %549 = vmatpush2.msra.mxu0 %v201
    %550 = vmatprep.subr.mxu0 %v194
    %551 = vmatpush2.msra.mxu0 %v193
    %552 = vmatprep.subr.mxu0 %v186
    %553 = vmatpush2.msra.mxu0 %v185
    %554 = vmatprep.subr.mxu0 %v178
    %555 = vmatpush2.msra.mxu0 %v177
    %556 = vmatprep.subr.mxu0 %v170
    %557 = vmatpush2.msra.mxu0 %v169
    %558 = vmatprep.subr.mxu0 %v162
    %559 = vmatpush2.msra.mxu0 %v161
    %560 = vmatprep.mubr.f32.mxu0 %v26
    %561 = vmatmul.mubr.f32.gmra.mxu0 %v25
    %v562 = vpop.f32.mrf.mxu0
    %v563 = vadd.f32 0.0, %v562
    %v564 = vpop.f32.mrf.mxu0
    %v565 = vadd.f32 0.0, %v564
    %566 = vdwg.mxu0
    %567 = vst [vmem:[%s2] sm:$0xff] %v350
    %568 = vst [vmem:[%s2 + $0x8] sm:$0xff] %v352
    %569 = vst [vmem:[%s2 + $0x10] sm:$0xff] %v421
    %570 = vst [vmem:[%s2 + $0x18] sm:$0xff] %v423
    %571 = vst [vmem:[%s2 + $0x20] sm:$0xff] %v492
    %572 = vst [vmem:[%s2 + $0x28] sm:$0xff] %v494
    %573 = vst [vmem:[%s2 + $0x30] sm:$0xff] %v563
    %574 = vst [vmem:[%s2 + $0x38] sm:$0xff] %v565
    // Predicated region
    $region14: #{bilinear_interpolation_2d.1} parent=1 // pred_check
      _
    $region15: #{bilinear_interpolation_2d.1} parent=1 // pred_check_branch
      %576 = sbr.rel (0) target = $region17
    $region16: #{bilinear_interpolation_2d.1} parent=1 // pred_region
      _
    $region17: #{bilinear_interpolation_2d.1} parent=1 // pred_fallthru
      _
    // Predicated region
    $region18: #{bilinear_interpolation_2d.1} parent=1 // pred_check
      _
    $region19: #{bilinear_interpolation_2d.1} parent=1 // pred_check_branch
      %578 = sbr.rel (0) target = $region21
    $region20: #{bilinear_interpolation_2d.1} parent=1 // pred_region
      _
    $region21: #{bilinear_interpolation_2d.1} parent=1 // pred_fallthru
      _
    %579 = vsyncpa [#allocation3], 1

</llo_original>
